<compile_context>
chip_gen: v7x
topology: tpu7x:2x2x1
jax: 0.10.0
libtpu: 0.0.40
codegen_flags: <defaults>
</compile_context>

<pallas_src>
import functools

import numpy as np

import jax
import jax.numpy as jnp
from jax import lax
from jax.experimental import pallas as pl
from jax.experimental.pallas import tpu as pltpu

BN_EPS = 1e-5


# ----------------------------------------------------------------------------
# One-off probe: pin pltpu.roll's rotation direction (robust across versions).
# ----------------------------------------------------------------------------
@functools.lru_cache(maxsize=None)
def _roll_matches_np_roll() -> bool:
    def probe(x_ref, o_ref):
        o_ref[...] = pltpu.roll(x_ref[...], shift=1, axis=1)

    x = jnp.tile(jnp.arange(128, dtype=jnp.float32)[None, :], (8, 1))
    y = pl.pallas_call(
        probe, out_shape=jax.ShapeDtypeStruct((8, 128), jnp.float32))(x)
    # np.roll semantics: y[:, 1] == x[:, 0] == 0
    return bool(jax.device_get(y)[0, 1] == 0.0)


def _images_per_block(N, C_in, C_out):
    """Images folded per grid step: all of them on 1-TC chips, 2-way on v7x."""
    try:
        kind = jax.devices()[0].device_kind.lower()
    except Exception:
        kind = ""
    two_tc = ("v7" in kind) or ("tpu7" in kind)
    if two_tc and N % 2 == 0:
        nb = N // 2
        if (nb * C_in) % 8 == 0 and (nb * C_out) % 8 == 0:  # sublane-tile legal
            return nb
    return N


def _make_kernel(taps, pointwise_bf16):
    """taps: tuple of (tap_index, static lane shift) pairs."""

    def kernel(x_ref, wdw_ref, mask_ref, wblk_ref, shift_ref, o_ref):
        # Fused ReLU on the lane-dense (NB*C_in, H*W) tile.
        xr = jnp.maximum(x_ref[...], 0.0)

        # Depthwise dilated conv: each tap is a circular lane rotation of the
        # flattened plane (XLU), a validity mask (zero padding) and a per-row
        # (per-channel) weight.  Accumulator starts at the first tap.
        acc = None
        for t, sh in taps:
            shifted = xr if sh == 0 else pltpu.roll(xr, shift=sh, axis=1)
            term = (shifted * mask_ref[t:t + 1, :]) * wdw_ref[:, t:t + 1]
            acc = term if acc is None else acc + term

        # Pointwise 1x1 conv (+ folded BN scale) as one MXU matmul against a
        # tiny per-image block-diagonal weight; result tile is lane-dense.
        lhs, rhs = wblk_ref[...], acc
        if pointwise_bf16:  # optional v6e/v7x path; accumulation stays f32
            lhs, rhs = lhs.astype(jnp.bfloat16), rhs.astype(jnp.bfloat16)
        y = jnp.dot(lhs, rhs, preferred_element_type=jnp.float32)
        o_ref[...] = y + shift_ref[...]

    return kernel


def make_dilconv_forward(w_dw, w_pw, gamma, beta, running_mean, running_var, *,
                         N, H, W, kernel_size, stride, padding, dilation,
                         images_per_block=None, pointwise_bf16=False,
                         eps=BN_EPS):
    """Build a jitted NCHW->NCHW DilConv forward; all weight prep done once."""
    K, dil, pad = int(kernel_size), int(dilation), int(padding)
    C_in, C_out = int(w_dw.shape[0]), int(w_pw.shape[0])
    assert stride == 1, "TODO(synk): stride-2 DilConv not implemented"
    assert 2 * pad == dil * (K - 1), \
        "TODO(synk): only 'same'-size DilConv (2*pad == dil*(K-1)) implemented"
    HW = H * W
    assert HW % 128 == 0, "H*W should be a multiple of 128 (lane tile)"

    NB = images_per_block or _images_per_block(N, C_in, C_out)
    assert N % NB == 0 and (NB * C_in) % 8 == 0 and (NB * C_out) % 8 == 0
    G = N // NB

    # ---- one-time constant prep (NOT inside the per-call jitted graph) ------
    sign = 1 if _roll_matches_np_roll() else -1
    taps, masks = [], []
    hh = np.arange(H)[:, None]
    ww = np.arange(W)[None, :]
    for kh in range(K):
        for kw in range(K):
            dh, dw = kh * dil - pad, kw * dil - pad
            off = dh * W + dw                     # flat shift within the plane
            taps.append((len(taps), (sign * -off) % HW))
            m = ((hh + dh >= 0) & (hh + dh < H) &
                 (ww + dw >= 0) & (ww + dw < W)).astype(np.float32)
            masks.append(m.reshape(HW))
    mask = jnp.asarray(np.stack(masks))                          # (K*K, HW)

    wdw_rows = jnp.asarray(                                      # (NB*C_in, K*K)
        np.tile(np.asarray(w_dw, np.float32).reshape(C_in, K * K), (NB, 1)))

    # Fold eval-mode BN scale into the pointwise weight; keep only the shift.
    scale = np.asarray(gamma, np.float32) / np.sqrt(
        np.asarray(running_var, np.float32) + eps)
    shift = (np.asarray(beta, np.float32)
             - np.asarray(running_mean, np.float32) * scale)
    wpw_s = np.asarray(w_pw, np.float32).reshape(C_out, C_in) * scale[:, None]
    # Per-image block-diagonal (tiny: (NB*C_out, NB*C_in)); at production
    # channel counts this stays O((NB*C)^2) -- no W_out-sized kron anymore.
    wblk = jnp.asarray(np.kron(np.eye(NB, dtype=np.float32), wpw_s))
    shift_col = jnp.asarray(np.tile(shift, NB).reshape(NB * C_out, 1))

    kernel = _make_kernel(tuple(taps), pointwise_bf16)

    pc = pl.pallas_call(
        kernel,
        out_shape=jax.ShapeDtypeStruct((N * C_out, HW), jnp.float32),
        grid=(G,),
        in_specs=[
            pl.BlockSpec((NB * C_in, HW), lambda i: (i, 0)),
            pl.BlockSpec((NB * C_in, K * K), lambda i: (0, 0)),
            pl.BlockSpec((K * K, HW), lambda i: (0, 0)),
            pl.BlockSpec((NB * C_out, NB * C_in), lambda i: (0, 0)),
            pl.BlockSpec((NB * C_out, 1), lambda i: (0, 0)),
        ],
        out_specs=pl.BlockSpec((NB * C_out, HW), lambda i: (i, 0)),
        compiler_params=pltpu.CompilerParams(
            dimension_semantics=("parallel",)),
    )

    @jax.jit
    def forward(x_nchw):
        # NCHW -> (N*C_in, H*W): a FREE reshape (no transpose), lane-dense.
        x2d = x_nchw.astype(jnp.float32).reshape(N * C_in, HW)
        out2d = pc(x2d, wdw_rows, mask, wblk, shift_col)
        return out2d.reshape(N, C_out, H, W)       # free reshape back to NCHW

    return forward


# ----------------------------------------------------------------------------
# Pure-JAX reference (numerical check)
# ----------------------------------------------------------------------------
def ref_dilconv(x_nchw, w_dw, w_pw, gamma, beta, running_mean, running_var,
                *, kernel_size, stride, padding, dilation, eps=BN_EPS):
    C_in = x_nchw.shape[1]
    x = jnp.maximum(x_nchw.astype(jnp.float32), 0.0)
    y = lax.conv_general_dilated(
        x, w_dw.astype(jnp.float32),
        window_strides=(stride, stride),
        padding=[(padding, padding), (padding, padding)],
        rhs_dilation=(dilation, dilation),
        dimension_numbers=("NCHW", "OIHW", "NCHW"),
        feature_group_count=C_in,
        precision=lax.Precision.HIGHEST)
    y = lax.conv_general_dilated(
        y, w_pw.astype(jnp.float32),
        window_strides=(1, 1), padding="VALID",
        dimension_numbers=("NCHW", "OIHW", "NCHW"),
        precision=lax.Precision.HIGHEST)
    scale = gamma / jnp.sqrt(running_var + eps)
    shift = beta - running_mean * scale
    return y * scale[None, :, None, None] + shift[None, :, None, None]


# ----------------------------------------------------------------------------
if __name__ == "__main__":
    # DilConv(C_in=8, C_out=8, kernel_size=3, stride=1, padding=2, dilation=2)
    N, C_in, C_out, H, W = 2, 8, 8, 16, 16
    K, stride, padding, dilation = 3, 1, 2, 2

    key = jax.random.PRNGKey(0)
    kx, kdw, kpw, kg, kb = jax.random.split(key, 5)
    x = jax.random.normal(kx, (N, C_in, H, W), jnp.float32)       # NCHW like PyTorch
    w_dw = jax.random.normal(kdw, (C_in, 1, K, K), jnp.float32) / 3.0
    w_pw = jax.random.normal(kpw, (C_out, C_in, 1, 1), jnp.float32) / jnp.sqrt(C_in)
    gamma = 1.0 + 0.1 * jax.random.normal(kg, (C_out,), jnp.float32)
    beta = 0.1 * jax.random.normal(kb, (C_out,), jnp.float32)
    running_mean = jnp.zeros((C_out,), jnp.float32)    # eval-mode BN stats
    running_var = jnp.ones((C_out,), jnp.float32)

    fwd = make_dilconv_forward(
        w_dw, w_pw, gamma, beta, running_mean, running_var,
        N=N, H=H, W=W, kernel_size=K, stride=stride,
        padding=padding, dilation=dilation)

    out = jax.block_until_ready(fwd(x))
    assert out.shape == (N, C_out, H, W), out.shape

    ref = ref_dilconv(x, w_dw, w_pw, gamma, beta, running_mean, running_var,
                      kernel_size=K, stride=stride, padding=padding,
                      dilation=dilation)
    max_err = float(jnp.max(jnp.abs(out - ref)))
    assert bool(jnp.allclose(out, ref, atol=1e-4, rtol=1e-5)), \
        f"mismatch vs reference, max_abs_err={max_err}"

    print("KERNEL_OK")
</pallas_src>

<mosaic_0001>
module attributes {stable_mosaic.version = 11 : i64} {
  func.func @probe(%arg0: memref<8x128xf32, #tpu.memory_space<vmem>>, %arg1: memref<8x128xf32, #tpu.memory_space<vmem>>) attributes {dimension_semantics = [], scalar_prefetch = 0 : i64, scratch_operands = 0 : i64, tpu.core_type = #tpu.core_type<tc>} {
    %c0 = arith.constant 0 : index
    %c0_0 = arith.constant 0 : index
    %0 = vector.load %arg0[%c0, %c0_0] : memref<8x128xf32, #tpu.memory_space<vmem>>, vector<8x128xf32>
    %c1_i32 = arith.constant 1 : i32
    %1 = tpu.dynamic_rotate %0 by %c1_i32 dim 1 : vector<8x128xf32>, i32 -> vector<8x128xf32>
    %c0_1 = arith.constant 0 : index
    %c0_2 = arith.constant 0 : index
    %2 = vector.load %arg1[%c0_1, %c0_2] : memref<8x128xf32, #tpu.memory_space<vmem>>, vector<8x128xf32>
    tpu.vector_store %arg1[%c0_1, %c0_2], %1 {strides = array<i32>} : memref<8x128xf32, #tpu.memory_space<vmem>>, vector<8x128xf32>,
    return
  }
}

</mosaic_0001>

<llo_original>
// kernel: tpu_custom_call.1
$region0: #{tpu_custom_call.1}
  #allocation0 [shape = 'u32[]', space=smem, size = 0x4, offset = 0x4, fixed_abs, tag = 'smem constant byte address 0x4 - core index']
  #allocation1 [shape = 'u32[144,128]{1,0:T(1,128)}', space=vmem, size = 0x12000, scoped, tag = 'internal scratch']
  %s0 = inlined_call_operand.hbm [shape: f32[8,128], index: 0, kind: input, shape index: {}]
  %s1 = inlined_call_operand.hbm [shape: f32[8,128], index: 1, kind: output, shape index: {}]
  %s2 = sld [smem:[#allocation0]]
  $region18: #{tpu_custom_call.1} parent=0
    _
  %s4 = ssub.s32 1, %s2
  %s5 = scalar_select 0, %s4, %s2
  $region1: #{tpu_custom_call.1} parent=0
    #allocation2 [shape = 'u8[4096]{0}', space=vmem, size = 0x1000, scoped, tag = 'input window, operand 0, single buffered']
    #allocation3 [shape = 's32[1]{0}', space=sflag, size = 0x4, scoped, tag = 'scoped memory for tpu_custom_call.1']
    #allocation4 [shape = 's32[1]{0}', space=sflag, size = 0x4, scoped, tag = 'scoped memory for tpu_custom_call.1']
    #allocation5 [shape = 'u8[4096]{0}', space=vmem, size = 0x1000, scoped, tag = 'output window, operand 0, single buffered']
    %6 = vsyncpa [#allocation3], 0
    %7 = vsyncpa [#allocation4], 0
    // Predicated region
    $region2: #{tpu_custom_call.1} parent=1 // pred_check
      _
    $region3: #{tpu_custom_call.1} parent=1 // pred_check_branch
      %9 = sbr.rel (0) target = $region5
    $region4: #{tpu_custom_call.1} parent=1 // pred_region
      %s11 = ssub.s32 128, 128
      %12 = vsyncadd [#allocation3], %s11
      %s14 = sshll.u32 [#allocation2], 4
      %s15 = int_to_ptr.vmem [resolvable:$true] %s14
      %17 = dma.hbm_to_vmem [thread:$0]  %s0, 128, %s15, [#allocation3]
    $region5: #{tpu_custom_call.1} parent=1 // pred_fallthru
      _
    // Predicated region
    $region6: #{tpu_custom_call.1} parent=1 // pred_check
      _
    $region7: #{tpu_custom_call.1} parent=1 // pred_check_branch
      %19 = sbr.rel (0) target = $region9
    $region8: #{tpu_custom_call.1} parent=1 // pred_region
      %20 = dma.done [#allocation3], 128
    $region9: #{tpu_custom_call.1} parent=1 // pred_fallthru
      _
    %v21 = vld [vmem:[#allocation2] sm:$0xff]
    %22 = vrot.lane.b32.xlu0 %v21, 1
    %v23 = vpop.permute.xlu0 %22
    %24 = vst [vmem:[#allocation5] sm:$0xff] %v23
    // Predicated region
    $region10: #{tpu_custom_call.1} parent=1 // pred_check
      _
    $region11: #{tpu_custom_call.1} parent=1 // pred_check_branch
      %26 = sbr.rel (0) target = $region13
    $region12: #{tpu_custom_call.1} parent=1 // pred_region
      %s28 = ssub.s32 128, 128
      %29 = vsyncadd [#allocation4], %s28
      %s31 = sshll.u32 [#allocation5], 4
      %s32 = int_to_ptr.vmem [resolvable:$true] %s31
      %34 = dma.vmem_to_hbm [thread:$0]  %s32, 128, %s1, [#allocation4]
    $region13: #{tpu_custom_call.1} parent=1 // pred_fallthru
      _
    // Predicated region
    $region14: #{tpu_custom_call.1} parent=1 // pred_check
      _
    $region15: #{tpu_custom_call.1} parent=1 // pred_check_branch
      %36 = sbr.rel (0) target = $region17
    $region16: #{tpu_custom_call.1} parent=1 // pred_region
      %37 = dma.done [#allocation4], 128
    $region17: #{tpu_custom_call.1} parent=1 // pred_fallthru
      _
    %38 = vsyncpa [#allocation3], 1
    %39 = vsyncpa [#allocation4], 1

</llo_original>
